<compile_context>
chip_gen: v7x
topology: tpu7x:2x2x1
jax: 0.10.0
libtpu: 0.0.40
codegen_flags: <defaults>
</compile_context>

<pallas_src>
import math
import functools

import jax
import jax.numpy as jnp
from jax import lax
from jax.experimental import pallas as pl
from jax.experimental.pallas import tpu as pltpu


# ----------------------------------------------------------------------------
# Fused kernel: one batch element per grid point.
#   qkv   = x @ Wqkv                  (all heads at once; Q columns pre-scaled)
#   s_h   = q_h @ k_h^T + causal_bias (per head, statically unrolled)
#   p_h   = softmax(s_h) ; o_h = p_h @ v_h
#   out   = concat_h(o_h) @ Wproj + b
# ----------------------------------------------------------------------------
def mha_fused_kernel(x_ref, wqkv_ref, wproj_ref, b_ref, out_ref, *,
                     num_heads, head_dim):
    T = x_ref.shape[1]
    HD = num_heads * head_dim

    x = x_ref[0]                         # (T, C)
    wqkv = wqkv_ref[...]                 # (C, 3*H*D), Q columns pre-scaled

    # Single batched QKV projection for all heads (one MXU push).
    qkv = jnp.dot(x, wqkv, preferred_element_type=jnp.float32)   # (T, 3*H*D)

    # In-kernel causal mask as an additive bias (no tril DMA, no -inf math).
    row = lax.broadcasted_iota(jnp.int32, (T, T), 0)
    col = lax.broadcasted_iota(jnp.int32, (T, T), 1)
    causal_bias = jnp.where(row >= col, 0.0, -1e30).astype(jnp.float32)  # (T, T)

    head_outs = []
    for h in range(num_heads):           # static, unrolled (H is tiny)
        q = qkv[:, h * head_dim:(h + 1) * head_dim]                      # (T, D)
        k = qkv[:, HD + h * head_dim:HD + (h + 1) * head_dim]            # (T, D)
        v = qkv[:, 2 * HD + h * head_dim:2 * HD + (h + 1) * head_dim]    # (T, D)

        # Contract the D axes directly; no explicit k.T relayout. Scale is
        # already folded into q via the packed weight.
        s = lax.dot_general(q, k, (((1,), (1,)), ((), ())),
                            preferred_element_type=jnp.float32)          # (T, T)
        s = s + causal_bias

        # Numerically-stable softmax; reciprocal on the EUP.
        s = s - jnp.max(s, axis=-1, keepdims=True)
        p = jnp.exp(s)
        p = p * pl.reciprocal(jnp.sum(p, axis=-1, keepdims=True), approx=True)

        head_outs.append(jnp.dot(p, v, preferred_element_type=jnp.float32))

    y = jnp.concatenate(head_outs, axis=-1)                              # (T, H*D)

    # Output projection + bias, lane-dense (T, C) store.
    out = jnp.dot(y, wproj_ref[...], preferred_element_type=jnp.float32) + b_ref[...]
    out_ref[0] = out.astype(out_ref.dtype)


# ----------------------------------------------------------------------------
# Wrapper
# ----------------------------------------------------------------------------
def multi_head_attention(x, wq, wk, wv, w_proj, b_proj):
    """x: (B, T, C); wq/wk/wv: (H, C, D); w_proj: (H*D, C); b_proj: (1, C).
    Returns (B, T, C)."""
    B, T, C = x.shape
    H, _, D = wq.shape
    HD = H * D
    scale = float(C) ** -0.5   # PyTorch module scales by embedding_dim, not head_dim

    # Pack per-head weights (H, C, D) -> (C, H*D); head h occupies columns
    # [h*D, (h+1)*D), matching torch.cat's head-output ordering. The softmax
    # scale is folded into the Q block (one-off weight-side op, not per-step).
    def pack(w):
        return jnp.transpose(w, (1, 0, 2)).reshape(C, HD)

    wqkv = jnp.concatenate([pack(wq) * scale, pack(wk), pack(wv)], axis=1)  # (C, 3*H*D)

    kernel = functools.partial(mha_fused_kernel, num_heads=H, head_dim=D)

    out = pl.pallas_call(
        kernel,
        out_shape=jax.ShapeDtypeStruct((B, T, C), jnp.float32),
        grid_spec=pltpu.PrefetchScalarGridSpec(
            num_scalar_prefetch=0,
            grid=(B,),
            in_specs=[
                pl.BlockSpec((1, T, C), lambda b: (b, 0, 0)),      # x
                pl.BlockSpec((C, 3 * HD), lambda b: (0, 0)),       # Wqkv (grid-invariant)
                pl.BlockSpec((HD, C), lambda b: (0, 0)),           # Wproj (grid-invariant)
                pl.BlockSpec((1, C), lambda b: (0, 0)),            # bias  (grid-invariant)
            ],
            out_specs=pl.BlockSpec((1, T, C), lambda b: (b, 0, 0)),
        ),
        compiler_params=pltpu.CompilerParams(
            dimension_semantics=("parallel",)),   # shards B across TCs on v7x
    )(x, wqkv, w_proj, b_proj)

    # TODO(synk): dropout is identity in eval mode; no stochastic masking applied.
    return out


# ----------------------------------------------------------------------------
# Pure-JAX reference (mirrors the PyTorch forward) for correctness checking.
# ----------------------------------------------------------------------------
def reference_mha(x, wq, wk, wv, w_proj, b_proj, tril):
    B, T, C = x.shape
    H = wq.shape[0]
    outs = []
    for h in range(H):
        q = x @ wq[h]
        k = x @ wk[h]
        v = x @ wv[h]
        scores = (q @ jnp.swapaxes(k, -2, -1)) * (C ** -0.5)
        scores = jnp.where(tril[:T, :T] == 0, -jnp.inf, scores)
        p = jax.nn.softmax(scores, axis=-1)
        outs.append(p @ v)
    y = jnp.concatenate(outs, axis=-1)
    return y @ w_proj + b_proj[0]


if __name__ == "__main__":
    # Config: embedding_dim=32, block_size=8, number_of_heads=4, head_size=8
    B, T, C = 2, 8, 32
    H, D = 4, 8

    key = jax.random.PRNGKey(0)
    kx, kq, kk, kv, kp, kb = jax.random.split(key, 6)

    x = jax.random.normal(kx, (B, T, C), dtype=jnp.float32)

    # Deterministic parameter init (uniform, roughly matching nn.Linear scale).
    lim_in = 1.0 / math.sqrt(C)
    wq = jax.random.uniform(kq, (H, C, D), jnp.float32, -lim_in, lim_in)
    wk = jax.random.uniform(kk, (H, C, D), jnp.float32, -lim_in, lim_in)
    wv = jax.random.uniform(kv, (H, C, D), jnp.float32, -lim_in, lim_in)

    lim_proj = 1.0 / math.sqrt(H * D)
    w_proj = jax.random.uniform(kp, (H * D, C), jnp.float32, -lim_proj, lim_proj)
    b_proj = jax.random.uniform(kb, (1, C), jnp.float32, -lim_proj, lim_proj)

    tril = jnp.tril(jnp.ones((T, T), dtype=jnp.float32))  # reference only

    out = multi_head_attention(x, wq, wk, wv, w_proj, b_proj)
    out = jax.block_until_ready(out)

    ref = reference_mha(x, wq, wk, wv, w_proj, b_proj, tril)
    assert out.shape == (B, T, C)
    # approx=True reciprocal in the softmax denominator -> slightly looser tol.
    assert jnp.allclose(out, ref, atol=2e-3, rtol=2e-3), "mismatch vs reference"

    print("KERNEL_OK")
</pallas_src>

<mosaic_0001>
module attributes {stable_mosaic.version = 11 : i64} {
  func.func @mha_fused_kernel(%arg0: i32, %arg1: memref<1x8x32xf32, #tpu.memory_space<vmem>>, %arg2: memref<32x96xf32, #tpu.memory_space<vmem>>, %arg3: memref<32x32xf32, #tpu.memory_space<vmem>>, %arg4: memref<1x32xf32, #tpu.memory_space<vmem>>, %arg5: memref<1x8x32xf32, #tpu.memory_space<vmem>>) attributes {dimension_semantics = [#tpu.dimension_semantics<parallel>], iteration_bounds = array<i64: 2>, scalar_prefetch = 0 : i64, scratch_operands = 0 : i64, tpu.core_type = #tpu.core_type<tc>, window_params = [{transform_indices = @transform_0, window_bounds = array<i64: 1, 8, 32>}, {pipeline_mode = #tpu.pipeline_mode<synchronous>, transform_indices = @transform_1, window_bounds = array<i64: 32, 96>}, {pipeline_mode = #tpu.pipeline_mode<synchronous>, transform_indices = @transform_2, window_bounds = array<i64: 32, 32>}, {pipeline_mode = #tpu.pipeline_mode<synchronous>, transform_indices = @transform_3, window_bounds = array<i64: 1, 32>}, {transform_indices = @transform_4, window_bounds = array<i64: 1, 8, 32>}]} {
    %c0 = arith.constant 0 : index
    %c0_0 = arith.constant 0 : index
    %c0_1 = arith.constant 0 : index
    %0 = vector.load %arg1[%c0, %c0_0, %c0_1] : memref<1x8x32xf32, #tpu.memory_space<vmem>>, vector<1x8x32xf32>
    %1 = vector.shape_cast %0 : vector<1x8x32xf32> to vector<8x32xf32>
    %c0_2 = arith.constant 0 : index
    %c0_3 = arith.constant 0 : index
    %2 = vector.load %arg2[%c0_2, %c0_3] : memref<32x96xf32, #tpu.memory_space<vmem>>, vector<32x96xf32>
    %cst = arith.constant dense<0.000000e+00> : vector<8x96xf32>
    %3 = tpu.matmul %1, %2, %cst {dimension_numbers = #tpu.dot_dimension_numbers<[1], [0], [0], [1], [0, 0, 1, 1], [], []>} : vector<8x32xf32>, vector<32x96xf32>, vector<8x96xf32> -> vector<8x96xf32>
    %4 = tpu.iota {dimensions = array<i32: 0>} : vector<8x8xi32>
    %5 = tpu.iota {dimensions = array<i32: 1>} : vector<8x8xi32>
    %6 = arith.cmpi sge, %4, %5 : vector<8x8xi32>
    %cst_4 = arith.constant 0.000000e+00 : f32
    %cst_5 = arith.constant -1.000000e+30 : f32
    %7 = vector.broadcast %cst_4 : f32 to vector<8x8xf32>
    %8 = vector.broadcast %cst_5 : f32 to vector<8x8xf32>
    %9 = arith.select %6, %7, %8 : vector<8x8xi1>, vector<8x8xf32>
    %10 = vector.extract_strided_slice %3 {offsets = [0, 0], sizes = [8, 8], strides = [1, 1]} : vector<8x96xf32> to vector<8x8xf32>
    %11 = vector.extract_strided_slice %3 {offsets = [0, 32], sizes = [8, 8], strides = [1, 1]} : vector<8x96xf32> to vector<8x8xf32>
    %12 = vector.extract_strided_slice %3 {offsets = [0, 64], sizes = [8, 8], strides = [1, 1]} : vector<8x96xf32> to vector<8x8xf32>
    %cst_6 = arith.constant dense<0.000000e+00> : vector<8x8xf32>
    %13 = tpu.matmul %10, %11, %cst_6 {dimension_numbers = #tpu.dot_dimension_numbers<[1], [1], [0], [0], [0, 0, 1, 0], [], []>} : vector<8x8xf32>, vector<8x8xf32>, vector<8x8xf32> -> vector<8x8xf32>
    %14 = arith.addf %13, %9 : vector<8x8xf32>
    %cst_7 = arith.constant dense<0xFF800000> : vector<8xf32>
    %15 = vector.multi_reduction <maximumf>, %14, %cst_7 [1] : vector<8x8xf32> to vector<8xf32>
    %16 = vector.shape_cast %15 : vector<8xf32> to vector<8x1xf32>
    %17 = vector.broadcast %16 : vector<8x1xf32> to vector<8x8xf32>
    %18 = arith.subf %14, %17 : vector<8x8xf32>
    %19 = math.exp %18 : vector<8x8xf32>
    %cst_8 = arith.constant dense<0.000000e+00> : vector<8xf32>
    %20 = vector.multi_reduction <add>, %19, %cst_8 [1] : vector<8x8xf32> to vector<8xf32>
    %21 = vector.shape_cast %20 : vector<8xf32> to vector<8x1xf32>
    %22 = tpu.reciprocal %21 {approx = true} : vector<8x1xf32> -> vector<8x1xf32>
    %23 = vector.broadcast %22 : vector<8x1xf32> to vector<8x8xf32>
    %24 = arith.mulf %19, %23 : vector<8x8xf32>
    %cst_9 = arith.constant dense<0.000000e+00> : vector<8x8xf32>
    %25 = tpu.matmul %24, %12, %cst_9 {dimension_numbers = #tpu.dot_dimension_numbers<[1], [0], [0], [1], [0, 0, 1, 1], [], []>} : vector<8x8xf32>, vector<8x8xf32>, vector<8x8xf32> -> vector<8x8xf32>
    %26 = vector.extract_strided_slice %3 {offsets = [0, 8], sizes = [8, 8], strides = [1, 1]} : vector<8x96xf32> to vector<8x8xf32>
    %27 = vector.extract_strided_slice %3 {offsets = [0, 40], sizes = [8, 8], strides = [1, 1]} : vector<8x96xf32> to vector<8x8xf32>
    %28 = vector.extract_strided_slice %3 {offsets = [0, 72], sizes = [8, 8], strides = [1, 1]} : vector<8x96xf32> to vector<8x8xf32>
    %cst_10 = arith.constant dense<0.000000e+00> : vector<8x8xf32>
    %29 = tpu.matmul %26, %27, %cst_10 {dimension_numbers = #tpu.dot_dimension_numbers<[1], [1], [0], [0], [0, 0, 1, 0], [], []>} : vector<8x8xf32>, vector<8x8xf32>, vector<8x8xf32> -> vector<8x8xf32>
    %30 = arith.addf %29, %9 : vector<8x8xf32>
    %cst_11 = arith.constant dense<0xFF800000> : vector<8xf32>
    %31 = vector.multi_reduction <maximumf>, %30, %cst_11 [1] : vector<8x8xf32> to vector<8xf32>
    %32 = vector.shape_cast %31 : vector<8xf32> to vector<8x1xf32>
    %33 = vector.broadcast %32 : vector<8x1xf32> to vector<8x8xf32>
    %34 = arith.subf %30, %33 : vector<8x8xf32>
    %35 = math.exp %34 : vector<8x8xf32>
    %cst_12 = arith.constant dense<0.000000e+00> : vector<8xf32>
    %36 = vector.multi_reduction <add>, %35, %cst_12 [1] : vector<8x8xf32> to vector<8xf32>
    %37 = vector.shape_cast %36 : vector<8xf32> to vector<8x1xf32>
    %38 = tpu.reciprocal %37 {approx = true} : vector<8x1xf32> -> vector<8x1xf32>
    %39 = vector.broadcast %38 : vector<8x1xf32> to vector<8x8xf32>
    %40 = arith.mulf %35, %39 : vector<8x8xf32>
    %cst_13 = arith.constant dense<0.000000e+00> : vector<8x8xf32>
    %41 = tpu.matmul %40, %28, %cst_13 {dimension_numbers = #tpu.dot_dimension_numbers<[1], [0], [0], [1], [0, 0, 1, 1], [], []>} : vector<8x8xf32>, vector<8x8xf32>, vector<8x8xf32> -> vector<8x8xf32>
    %42 = vector.extract_strided_slice %3 {offsets = [0, 16], sizes = [8, 8], strides = [1, 1]} : vector<8x96xf32> to vector<8x8xf32>
    %43 = vector.extract_strided_slice %3 {offsets = [0, 48], sizes = [8, 8], strides = [1, 1]} : vector<8x96xf32> to vector<8x8xf32>
    %44 = vector.extract_strided_slice %3 {offsets = [0, 80], sizes = [8, 8], strides = [1, 1]} : vector<8x96xf32> to vector<8x8xf32>
    %cst_14 = arith.constant dense<0.000000e+00> : vector<8x8xf32>
    %45 = tpu.matmul %42, %43, %cst_14 {dimension_numbers = #tpu.dot_dimension_numbers<[1], [1], [0], [0], [0, 0, 1, 0], [], []>} : vector<8x8xf32>, vector<8x8xf32>, vector<8x8xf32> -> vector<8x8xf32>
    %46 = arith.addf %45, %9 : vector<8x8xf32>
    %cst_15 = arith.constant dense<0xFF800000> : vector<8xf32>
    %47 = vector.multi_reduction <maximumf>, %46, %cst_15 [1] : vector<8x8xf32> to vector<8xf32>
    %48 = vector.shape_cast %47 : vector<8xf32> to vector<8x1xf32>
    %49 = vector.broadcast %48 : vector<8x1xf32> to vector<8x8xf32>
    %50 = arith.subf %46, %49 : vector<8x8xf32>
    %51 = math.exp %50 : vector<8x8xf32>
    %cst_16 = arith.constant dense<0.000000e+00> : vector<8xf32>
    %52 = vector.multi_reduction <add>, %51, %cst_16 [1] : vector<8x8xf32> to vector<8xf32>
    %53 = vector.shape_cast %52 : vector<8xf32> to vector<8x1xf32>
    %54 = tpu.reciprocal %53 {approx = true} : vector<8x1xf32> -> vector<8x1xf32>
    %55 = vector.broadcast %54 : vector<8x1xf32> to vector<8x8xf32>
    %56 = arith.mulf %51, %55 : vector<8x8xf32>
    %cst_17 = arith.constant dense<0.000000e+00> : vector<8x8xf32>
    %57 = tpu.matmul %56, %44, %cst_17 {dimension_numbers = #tpu.dot_dimension_numbers<[1], [0], [0], [1], [0, 0, 1, 1], [], []>} : vector<8x8xf32>, vector<8x8xf32>, vector<8x8xf32> -> vector<8x8xf32>
    %58 = vector.extract_strided_slice %3 {offsets = [0, 24], sizes = [8, 8], strides = [1, 1]} : vector<8x96xf32> to vector<8x8xf32>
    %59 = vector.extract_strided_slice %3 {offsets = [0, 56], sizes = [8, 8], strides = [1, 1]} : vector<8x96xf32> to vector<8x8xf32>
    %60 = vector.extract_strided_slice %3 {offsets = [0, 88], sizes = [8, 8], strides = [1, 1]} : vector<8x96xf32> to vector<8x8xf32>
    %cst_18 = arith.constant dense<0.000000e+00> : vector<8x8xf32>
    %61 = tpu.matmul %58, %59, %cst_18 {dimension_numbers = #tpu.dot_dimension_numbers<[1], [1], [0], [0], [0, 0, 1, 0], [], []>} : vector<8x8xf32>, vector<8x8xf32>, vector<8x8xf32> -> vector<8x8xf32>
    %62 = arith.addf %61, %9 : vector<8x8xf32>
    %cst_19 = arith.constant dense<0xFF800000> : vector<8xf32>
    %63 = vector.multi_reduction <maximumf>, %62, %cst_19 [1] : vector<8x8xf32> to vector<8xf32>
    %64 = vector.shape_cast %63 : vector<8xf32> to vector<8x1xf32>
    %65 = vector.broadcast %64 : vector<8x1xf32> to vector<8x8xf32>
    %66 = arith.subf %62, %65 : vector<8x8xf32>
    %67 = math.exp %66 : vector<8x8xf32>
    %cst_20 = arith.constant dense<0.000000e+00> : vector<8xf32>
    %68 = vector.multi_reduction <add>, %67, %cst_20 [1] : vector<8x8xf32> to vector<8xf32>
    %69 = vector.shape_cast %68 : vector<8xf32> to vector<8x1xf32>
    %70 = tpu.reciprocal %69 {approx = true} : vector<8x1xf32> -> vector<8x1xf32>
    %71 = vector.broadcast %70 : vector<8x1xf32> to vector<8x8xf32>
    %72 = arith.mulf %67, %71 : vector<8x8xf32>
    %cst_21 = arith.constant dense<0.000000e+00> : vector<8x8xf32>
    %73 = tpu.matmul %72, %60, %cst_21 {dimension_numbers = #tpu.dot_dimension_numbers<[1], [0], [0], [1], [0, 0, 1, 1], [], []>} : vector<8x8xf32>, vector<8x8xf32>, vector<8x8xf32> -> vector<8x8xf32>
    %74 = tpu.concatenate %25, %41, %57, %73 in 1 : vector<8x8xf32>, vector<8x8xf32>, vector<8x8xf32>, vector<8x8xf32> -> vector<8x32xf32>
    %c0_22 = arith.constant 0 : index
    %c0_23 = arith.constant 0 : index
    %75 = vector.load %arg3[%c0_22, %c0_23] : memref<32x32xf32, #tpu.memory_space<vmem>>, vector<32x32xf32>
    %cst_24 = arith.constant dense<0.000000e+00> : vector<8x32xf32>
    %76 = tpu.matmul %74, %75, %cst_24 {dimension_numbers = #tpu.dot_dimension_numbers<[1], [0], [0], [1], [0, 0, 1, 1], [], []>} : vector<8x32xf32>, vector<32x32xf32>, vector<8x32xf32> -> vector<8x32xf32>
    %c0_25 = arith.constant 0 : index
    %c0_26 = arith.constant 0 : index
    %77 = vector.load %arg4[%c0_25, %c0_26] : memref<1x32xf32, #tpu.memory_space<vmem>>, vector<1x32xf32>
    %78 = vector.broadcast %77 : vector<1x32xf32> to vector<8x32xf32>
    %79 = arith.addf %76, %78 : vector<8x32xf32>
    %c0_27 = arith.constant 0 : index
    %c0_28 = arith.constant 0 : index
    %c0_29 = arith.constant 0 : index
    %80 = vector.load %arg5[%c0_27, %c0_28, %c0_29] : memref<1x8x32xf32, #tpu.memory_space<vmem>>, vector<1x8x32xf32>
    %81 = vector.shape_cast %80 : vector<1x8x32xf32> to vector<8x32xf32>
    %82 = vector.shape_cast %79 : vector<8x32xf32> to vector<1x8x32xf32>
    tpu.vector_store %arg5[%c0_27, %c0_28, %c0_29], %82 {strides = array<i32>} : memref<1x8x32xf32, #tpu.memory_space<vmem>>, vector<1x8x32xf32>,
    return
  }
  func.func @transform_0(%arg0: i32) -> (i32, i32, i32) {
    %c0_i32 = arith.constant 0 : i32
    %c0_i32_0 = arith.constant 0 : i32
    %c0_i32_1 = arith.constant 0 : i32
    return %arg0, %c0_i32, %c0_i32_0 : i32, i32, i32
  }
  func.func @transform_1(%arg0: i32) -> (i32, i32) {
    %c0_i32 = arith.constant 0 : i32
    %c0_i32_0 = arith.constant 0 : i32
    %c0_i32_1 = arith.constant 0 : i32
    return %c0_i32, %c0_i32_0 : i32, i32
  }
  func.func @transform_2(%arg0: i32) -> (i32, i32) {
    %c0_i32 = arith.constant 0 : i32
    %c0_i32_0 = arith.constant 0 : i32
    %c0_i32_1 = arith.constant 0 : i32
    return %c0_i32, %c0_i32_0 : i32, i32
  }
  func.func @transform_3(%arg0: i32) -> (i32, i32) {
    %c0_i32 = arith.constant 0 : i32
    %c0_i32_0 = arith.constant 0 : i32
    %c0_i32_1 = arith.constant 0 : i32
    return %c0_i32, %c0_i32_0 : i32, i32
  }
  func.func @transform_4(%arg0: i32) -> (i32, i32, i32) {
    %c0_i32 = arith.constant 0 : i32
    %c0_i32_0 = arith.constant 0 : i32
    %c0_i32_1 = arith.constant 0 : i32
    return %arg0, %c0_i32, %c0_i32_0 : i32, i32, i32
  }
}

</mosaic_0001>

<llo_original>
// kernel: tpu_custom_call.1
$region0: #{tpu_custom_call.1}
  #allocation0 [shape = 'u32[]', space=smem, size = 0x4, offset = 0x4, fixed_abs, tag = 'smem constant byte address 0x4 - core index']
  #allocation1 [shape = 'u32[144,128]{1,0:T(1,128)}', space=vmem, size = 0x12000, scoped, tag = 'internal scratch']
  %s0 = inlined_call_operand.hbm [shape: f32[2,8,32], index: 0, kind: input, shape index: {}]
  %s1 = inlined_call_operand.hbm [shape: f32[32,96], index: 1, kind: input, shape index: {}]
  %s2 = inlined_call_operand.hbm [shape: f32[32,32], index: 2, kind: input, shape index: {}]
  %s3 = inlined_call_operand.vmem [shape: f32[1,32], index: 3, kind: input, shape index: {}]
  %s4 = inlined_call_operand.hbm [shape: f32[2,8,32], index: 4, kind: output, shape index: {}]
  %s5 = sld [smem:[#allocation0]]
  $region61: #{tpu_custom_call.1} parent=0
    _
  %s7 = ssub.s32 1, %s5
  %s8 = scalar_select 0, %s7, %s5
  $region1: #{tpu_custom_call.1} parent=0
    #allocation2 [shape = 'u8[8192]{0}', space=vmem, size = 0x2000, scoped, tag = 'input window, operand 0']
    #allocation3 [shape = 's32[2]{0}', space=sflag, size = 0x8, scoped, tag = 'scoped memory for tpu_custom_call.1']
    #allocation4 [shape = 's32[2]{0}', space=sflag, size = 0x8, scoped, tag = 'scoped memory for tpu_custom_call.1']
    #allocation5 [shape = 'u8[16384]{0}', space=vmem, size = 0x4000, scoped, tag = 'input window, operand 1, single buffered']
    #allocation6 [shape = 's32[1]{0}', space=sflag, size = 0x4, scoped, tag = 'scoped memory for tpu_custom_call.1']
    #allocation7 [shape = 'u8[16384]{0}', space=vmem, size = 0x4000, scoped, tag = 'input window, operand 2, single buffered']
    #allocation8 [shape = 'u8[8192]{0}', space=vmem, size = 0x2000, scoped, tag = 'output window, operand 0']
    %9 = vsyncpa [#allocation3], 0
    %s10 = scalar_lea.sflag [#allocation3], 1
    %11 = vsyncpa %s10, 0
    %12 = vsyncpa [#allocation6], 0
    %13 = vsyncpa [#allocation4], 0
    %s14 = scalar_lea.sflag [#allocation4], 1
    %15 = vsyncpa %s14, 0
    loop: start=0, step=1, limit=4
    $region2: #{tpu_custom_call.1} parent=1 // loop_pre_header
      _
    $region3: #{tpu_custom_call.1} parent=1 // loop_header
      %s17 = sphi 0, %s21
      %p18 = scmp.ge.s32.totalorder %s17, 4
      %s27 = sphi 0, %s29
      %s30 = sphi 0, %s27
      %s31 = sphi 0, %s30
      %s47 = sphi 0, %s31
      %s51 = sphi 0, %s51
      %s53 = sphi 0, %s51
      %s54 = sphi 0, %s53
      %s68 = sphi 0, %s54
      %s72 = sphi 0, %s72
      %s74 = sphi 0, %s72
      %s75 = sphi 0, %s74
      %s89 = sphi 0, %s75
      %s93 = sphi 0, %s93
      %s95 = sphi 0, %s93
      %s96 = sphi 0, %s95
      %s110 = sphi 0, %s96
      %s116 = sphi 0, %s118
      %s119 = sphi 0, %s116
      %s120 = sphi 0, %s119
      %s136 = sphi 0, %s120
    $region4: #{tpu_custom_call.1} parent=1 // loop_header_branch
      %20 = sbr.rel (%p18) target = $region8
    $region5: #{tpu_custom_call.1} parent=1 // loop_body
      %s22 = ssub.s32 %s17, 1
      %s23 = ssub.s32 %s17, 2
      %s24 = sadd.s32 %s17, 1
      %s25 = ssub.s32 %s17, %s24
      %p26 = scmp.eq.s32.totalorder %s25, 0
      %s28 = sadd.s32 %s27, 1
      %s29 = scalar_select %p26, %s27, %s28
      %p32 = pneg %p26
      %p33 = scmp.eq.s32.totalorder %s17, 1
      %p34 = por %p32, %p33
      %p35 = scmp.ne.s32.totalorder %s27, %s30
      %p36 = scmp.eq.s32.totalorder %s17, 0
      %p37 = por %p35, %p36
      %p38 = scmp.ne.s32.totalorder %s27, %s30
      %p39 = scmp.eq.s32.totalorder %s22, 1
      %p40 = por %p38, %p39
      %p41 = scmp.ne.s32.totalorder %s30, %s31
      %p42 = scmp.eq.s32.totalorder %s22, 0
      %p43 = por %p41, %p42
      %p44 = scmp.ne.s32.totalorder %s30, %s31
      %p45 = scmp.eq.s32.totalorder %s23, 1
      %p46 = por %p44, %p45
      %p48 = scmp.ne.s32.totalorder %s31, %s47
      %p49 = scmp.eq.s32.totalorder %s23, 0
      %p50 = por %p48, %p49
      %s52 = sadd.s32 %s51, 1
      %p55 = scmp.eq.s32.totalorder %s17, 1
      %p56 = scmp.ne.s32.totalorder %s51, %s53
      %p57 = scmp.eq.s32.totalorder %s17, 0
      %p58 = por %p56, %p57
      %p59 = scmp.ne.s32.totalorder %s51, %s53
      %p60 = scmp.eq.s32.totalorder %s22, 1
      %p61 = por %p59, %p60
      %p62 = scmp.ne.s32.totalorder %s53, %s54
      %p63 = scmp.eq.s32.totalorder %s22, 0
      %p64 = por %p62, %p63
      %p65 = scmp.ne.s32.totalorder %s53, %s54
      %p66 = scmp.eq.s32.totalorder %s23, 1
      %p67 = por %p65, %p66
      %p69 = scmp.ne.s32.totalorder %s54, %s68
      %p70 = scmp.eq.s32.totalorder %s23, 0
      %p71 = por %p69, %p70
      %s73 = sadd.s32 %s72, 1
      %p76 = scmp.eq.s32.totalorder %s17, 1
      %p77 = scmp.ne.s32.totalorder %s72, %s74
      %p78 = scmp.eq.s32.totalorder %s17, 0
      %p79 = por %p77, %p78
      %p80 = scmp.ne.s32.totalorder %s72, %s74
      %p81 = scmp.eq.s32.totalorder %s22, 1
      %p82 = por %p80, %p81
      %p83 = scmp.ne.s32.totalorder %s74, %s75
      %p84 = scmp.eq.s32.totalorder %s22, 0
      %p85 = por %p83, %p84
      %p86 = scmp.ne.s32.totalorder %s74, %s75
      %p87 = scmp.eq.s32.totalorder %s23, 1
      %p88 = por %p86, %p87
      %p90 = scmp.ne.s32.totalorder %s75, %s89
      %p91 = scmp.eq.s32.totalorder %s23, 0
      %p92 = por %p90, %p91
      %s94 = sadd.s32 %s93, 1
      %p97 = scmp.eq.s32.totalorder %s17, 1
      %p98 = scmp.ne.s32.totalorder %s93, %s95
      %p99 = scmp.eq.s32.totalorder %s17, 0
      %p100 = por %p98, %p99
      %p101 = scmp.ne.s32.totalorder %s93, %s95
      %p102 = scmp.eq.s32.totalorder %s22, 1
      %p103 = por %p101, %p102
      %p104 = scmp.ne.s32.totalorder %s95, %s96
      %p105 = scmp.eq.s32.totalorder %s22, 0
      %p106 = por %p104, %p105
      %p107 = scmp.ne.s32.totalorder %s95, %s96
      %p108 = scmp.eq.s32.totalorder %s23, 1
      %p109 = por %p107, %p108
      %p111 = scmp.ne.s32.totalorder %s96, %s110
      %p112 = scmp.eq.s32.totalorder %s23, 0
      %p113 = por %p111, %p112
      %s114 = ssub.s32 %s17, %s24
      %p115 = scmp.eq.s32.totalorder %s114, 0
      %s117 = sadd.s32 %s116, 1
      %s118 = scalar_select %p115, %s116, %s117
      %p121 = pneg %p115
      %p122 = scmp.eq.s32.totalorder %s17, 1
      %p123 = por %p121, %p122
      %p124 = scmp.ne.s32.totalorder %s116, %s119
      %p125 = scmp.eq.s32.totalorder %s17, 0
      %p126 = por %p124, %p125
      %p127 = scmp.ne.s32.totalorder %s116, %s119
      %p128 = scmp.eq.s32.totalorder %s22, 1
      %p129 = por %p127, %p128
      %p130 = scmp.ne.s32.totalorder %s119, %s120
      %p131 = scmp.eq.s32.totalorder %s22, 0
      %p132 = por %p130, %p131
      %p133 = scmp.ne.s32.totalorder %s119, %s120
      %p134 = scmp.eq.s32.totalorder %s23, 1
      %p135 = por %p133, %p134
      %p137 = scmp.ne.s32.totalorder %s120, %s136
      %p138 = scmp.eq.s32.totalorder %s23, 0
      %p139 = por %p137, %p138
      %p140 = scmp.le.s32.totalorder 1, %s17
      %p141 = scmp.lt.s32.totalorder %s17, 3
      %p142 = pnand %p140, %p141
      %p143 = pneg %p142
      // Predicated region
      $region9: #{tpu_custom_call.1} parent=5 // pred_check
        _
      $region10: #{tpu_custom_call.1} parent=5 // pred_check_branch
        %145 = sbr.rel (%p142) target = $region12
      $region11: #{tpu_custom_call.1} parent=5 // pred_region
        %s146 = ssub.s32 %s17, 1
        // Predicated region
        $region13: #{tpu_custom_call.1} parent=11 // pred_check
          %p147 = pneg %p64
        $region14: #{tpu_custom_call.1} parent=11 // pred_check_branch
          %149 = sbr.rel (%p147) target = $region16
        $region15: #{tpu_custom_call.1} parent=11 // pred_region
          %s151 = ssub.s32 512, 512
          %152 = vsyncadd [#allocation6], %s151
          %s153 = sshll.u32 [#allocation5], 4
          %s154 = int_to_ptr.vmem [resolvable:$true] %s153
          %159 = dma.hbm_to_vmem [thread:$0]  %s1, 512, %s154, [#allocation6], 128, 128, 8
        $region16: #{tpu_custom_call.1} parent=11 // pred_fallthru
          _
        // Predicated region
        $region17: #{tpu_custom_call.1} parent=11 // pred_check
          %p160 = pneg %p85
        $region18: #{tpu_custom_call.1} parent=11 // pred_check_branch
          %162 = sbr.rel (%p160) target = $region20
        $region19: #{tpu_custom_call.1} parent=11 // pred_region
          %s164 = ssub.s32 512, 512
          %165 = vsyncadd [#allocation6], %s164
          %s166 = sshll.u32 [#allocation7], 4
          %s167 = int_to_ptr.vmem [resolvable:$true] %s166
          %172 = dma.hbm_to_vmem [thread:$0]  %s2, 512, %s167, [#allocation6], 128, 128, 8
        $region20: #{tpu_custom_call.1} parent=11 // pred_fallthru
          _
        // Predicated region
        $region21: #{tpu_custom_call.1} parent=11 // pred_check
          %p173 = pneg %p106
        $region22: #{tpu_custom_call.1} parent=11 // pred_check_branch
          %175 = sbr.rel (%p173) target = $region24
        $region23: #{tpu_custom_call.1} parent=11 // pred_region
          _
        $region24: #{tpu_custom_call.1} parent=11 // pred_fallthru
          _
      $region12: #{tpu_custom_call.1} parent=5 // pred_fallthru
        _
      %p176 = scmp.lt.s32.totalorder %s17, 2
      // Predicated region
      $region25: #{tpu_custom_call.1} parent=5 // pred_check
        %p177 = pneg %p176
      $region26: #{tpu_custom_call.1} parent=5 // pred_check_branch
        %179 = sbr.rel (%p177) target = $region28
      $region27: #{tpu_custom_call.1} parent=5 // pred_region
        // Predicated region
        $region29: #{tpu_custom_call.1} parent=27 // pred_check
          %p180 = pneg %p37
        $region30: #{tpu_custom_call.1} parent=27 // pred_check_branch
          %182 = sbr.rel (%p180) target = $region32
        $region31: #{tpu_custom_call.1} parent=27 // pred_region
          %s183 = sand.u32 %s27, 1
          %s184 = scalar_lea.sflag [#allocation3], %s183
          %s185 = sand.u32 %s27, 1
          %s186 = smul.addr %s185, 8
          %s187 = scalar_lea.vmem [#allocation2], %s186
          %s189 = ssub.s32 128, 128
          %190 = vsyncadd %s184, %s189
          %s191 = smul.addr %s17, 128
          %s192 = scalar_lea.hbm %s0, %s191
          %s194 = sshll.u32 %s187, 4
          %s195 = int_to_ptr.vmem [resolvable:$true] %s194
          %197 = dma.hbm_to_vmem [thread:$0]  %s192, 128, %s195, %s184
        $region32: #{tpu_custom_call.1} parent=27 // pred_fallthru
          _
      $region28: #{tpu_custom_call.1} parent=5 // pred_fallthru
        _
      %p198 = scmp.le.s32.totalorder 1, %s17
      %p199 = scmp.lt.s32.totalorder %s17, 3
      %p200 = pnand %p198, %p199
      %p201 = pneg %p200
      // Predicated region
      $region33: #{tpu_custom_call.1} parent=5 // pred_check
        _
      $region34: #{tpu_custom_call.1} parent=5 // pred_check_branch
        %203 = sbr.rel (%p200) target = $region36
      $region35: #{tpu_custom_call.1} parent=5 // pred_region
        %s204 = ssub.s32 %s17, 1
        %s205 = sand.u32 %s30, 1
        %s206 = scalar_lea.sflag [#allocation3], %s205
        %s207 = sand.u32 %s30, 1
        %s208 = smul.addr %s207, 8
        %s209 = scalar_lea.vmem [#allocation2], %s208
        // Predicated region
        $region37: #{tpu_custom_call.1} parent=35 // pred_check
          %p210 = pneg %p43
        $region38: #{tpu_custom_call.1} parent=35 // pred_check_branch
          %212 = sbr.rel (%p210) target = $region40
        $region39: #{tpu_custom_call.1} parent=35 // pred_region
          %213 = dma.done %s206, 128
        $region40: #{tpu_custom_call.1} parent=35 // pred_fallthru
          _
        // Predicated region
        $region41: #{tpu_custom_call.1} parent=35 // pred_check
          %p214 = pneg %p64
        $region42: #{tpu_custom_call.1} parent=35 // pred_check_branch
          %216 = sbr.rel (%p214) target = $region44
        $region43: #{tpu_custom_call.1} parent=35 // pred_region
          %217 = dma.done [#allocation6], 512
        $region44: #{tpu_custom_call.1} parent=35 // pred_fallthru
          _
        // Predicated region
        $region45: #{tpu_custom_call.1} parent=35 // pred_check
          %p218 = pneg %p85
        $region46: #{tpu_custom_call.1} parent=35 // pred_check_branch
          %220 = sbr.rel (%p218) target = $region48
        $region47: #{tpu_custom_call.1} parent=35 // pred_region
          %221 = dma.done [#allocation6], 512
        $region48: #{tpu_custom_call.1} parent=35 // pred_fallthru
          _
        %s222 = sand.u32 %s30, 1
        %s223 = scalar_lea.sflag [#allocation3], %s222
        %s224 = sand.u32 %s30, 1
        %s225 = smul.addr %s224, 8
        %s226 = scalar_lea.vmem [#allocation2], %s225
        %p227 = pneg %p43
        %p228 = pneg %p40
        %p229 = pneg %p64
        %p230 = pneg %p61
        %p231 = pneg %p85
        %p232 = pneg %p82
        %p233 = pneg %p106
        %p234 = pneg %p103
        %p235 = pneg %p132
        %p236 = pneg %p129
        %s237 = sand.u32 %s119, 1
        %s238 = scalar_lea.sflag [#allocation4], %s237
        %s239 = sand.u32 %s119, 1
        %s240 = smul.addr %s239, 8
        %s241 = scalar_lea.vmem [#allocation8], %s240
        %v242 = vld [vmem:[%s209] sm:$0xff]
        %v243 = vld [vmem:[#allocation5] sm:$0xff]
        %v244 = vld [vmem:[#allocation5 + $0x8] sm:$0xff]
        %v245 = vld [vmem:[#allocation5 + $0x10] sm:$0xff]
        %v246 = vld [vmem:[#allocation5 + $0x18] sm:$0xff]
        %vm247 = vcmask 261120
        %v249 = vsel %vm247, %v242, 0
        %251 = vmatprep.subr.mxu0 0.0
        %252 = vmatpush1.msra.mxu0 %v243
        %253 = vmatprep.subr.mxu0 0.0
        %254 = vmatpush1.msra.mxu0 %v244
        %255 = vmatprep.subr.mxu0 0.0
        %256 = vmatpush1.msra.mxu0 %v245
        %257 = vmatprep.subr.mxu0 0.0
        %258 = vmatpush1.msra.mxu0 %v246
        %259 = vmatprep.subr.mxu0 0.0
        %260 = vmatpush1.msra.mxu0 0.0
        %261 = vmatprep.subr.mxu0 0.0
        %262 = vmatpush1.msra.mxu0 0.0
        %263 = vmatprep.subr.mxu0 0.0
        %264 = vmatpush1.msra.mxu0 0.0
        %265 = vmatprep.subr.mxu0 0.0
        %266 = vmatpush1.msra.mxu0 0.0
        %267 = vmatprep.subr.mxu0 0.0
        %268 = vmatpush1.msra.mxu0 0.0
        %269 = vmatprep.subr.mxu0 0.0
        %270 = vmatpush1.msra.mxu0 0.0
        %271 = vmatprep.subr.mxu0 0.0
        %272 = vmatpush1.msra.mxu0 0.0
        %273 = vmatprep.subr.mxu0 0.0
        %274 = vmatpush1.msra.mxu0 0.0
        %275 = vmatprep.subr.mxu0 0.0
        %276 = vmatpush1.msra.mxu0 0.0
        %277 = vmatprep.subr.mxu0 0.0
        %278 = vmatpush1.msra.mxu0 0.0
        %279 = vmatprep.subr.mxu0 0.0
        %280 = vmatpush1.msra.mxu0 0.0
        %281 = vmatprep.subr.mxu0 0.0
        %282 = vmatpush1.msra.mxu0 0.0
        %283 = vmatprep.subr.mxu0 0.0
        %284 = vmatpush1.msra.mxu0 0.0
        %285 = vmatprep.subr.mxu0 0.0
        %286 = vmatpush1.msra.mxu0 0.0
        %287 = vmatprep.subr.mxu0 0.0
        %288 = vmatpush1.msra.mxu0 0.0
        %289 = vmatprep.subr.mxu0 0.0
        %290 = vmatpush1.msra.mxu0 0.0
        %291 = vmatprep.subr.mxu0 0.0
        %292 = vmatpush1.msra.mxu0 0.0
        %293 = vmatprep.subr.mxu0 0.0
        %294 = vmatpush1.msra.mxu0 0.0
        %295 = vmatprep.subr.mxu0 0.0
        %296 = vmatpush1.msra.mxu0 0.0
        %297 = vmatprep.subr.mxu0 0.0
        %298 = vmatpush1.msra.mxu0 0.0
        %299 = vmatprep.subr.mxu0 0.0
        %300 = vmatpush1.msra.mxu0 0.0
        %301 = vmatprep.subr.mxu0 0.0
        %302 = vmatpush1.msra.mxu0 0.0
        %303 = vmatprep.subr.mxu0 0.0
        %304 = vmatpush1.msra.mxu0 0.0
        %305 = vmatprep.subr.mxu0 0.0
        %306 = vmatpush1.msra.mxu0 0.0
        %307 = vmatprep.subr.mxu0 0.0
        %308 = vmatpush1.msra.mxu0 0.0
        %309 = vmatprep.subr.mxu0 0.0
        %310 = vmatpush1.msra.mxu0 0.0
        %311 = vmatprep.subr.mxu0 0.0
        %312 = vmatpush1.msra.mxu0 0.0
        %313 = vmatprep.subr.mxu0 0.0
        %314 = vmatpush1.msra.mxu0 0.0
        %315 = vmatprep.mubr.f32.mxu0 0.0
        %316 = vmatmul.mubr.f32.gmra.mrb[0].mxu0 %v249
        %v317 = vpop.f32.mrb[0].mxu0
        %v318 = vadd.f32 0.0, %v317
        %v319 = vpop.f32.mrb[0].mxu0
        %320 = vdwg.mxu0
        %v321 = vlaneseq
        %v322 = vshrl.u32 %v321, 7
        %v323 = vlaneseq
        %v324 = vand.u32 %v323, 127
        %vm325 = vcmp.ge.s32.totalorder %v322, %v324
        %v326 = vsel %vm325, 0.0, -1e+30
        %328 = vrot.lane.b32.xlu0 %v318, 96
        %v329 = vpop.permute.xlu0 %328
        %vm330 = vcmask 64512
        %v331 = vsel %vm330, %v318, 0
        %v333 = vsel %vm330, %v329, 0
        %335 = vmatprep.subr.mxu0 0.0
        %336 = vmatpush1.xpose.msra.mxu0 %v333
        %337 = vmatprep.subr.mxu0 0.0
        %338 = vmatpush1.xpose.msra.mxu0 0.0
        %339 = vmatprep.subr.mxu0 0.0
        %340 = vmatpush1.xpose.msra.mxu0 0.0
        %341 = vmatprep.subr.mxu0 0.0
        %342 = vmatpush1.xpose.msra.mxu0 0.0
        %343 = vmatprep.subr.mxu0 0.0
        %344 = vmatpush1.xpose.msra.mxu0 0.0
        %345 = vmatprep.subr.mxu0 0.0
        %346 = vmatpush1.xpose.msra.mxu0 0.0
        %347 = vmatprep.subr.mxu0 0.0
        %348 = vmatpush1.xpose.msra.mxu0 0.0
        %349 = vmatprep.subr.mxu0 0.0
        %350 = vmatpush1.xpose.msra.mxu0 0.0
        %351 = vmatprep.subr.mxu0 0.0
        %352 = vmatpush1.xpose.msra.mxu0 0.0
        %353 = vmatprep.subr.mxu0 0.0
        %354 = vmatpush1.xpose.msra.mxu0 0.0
        %355 = vmatprep.subr.mxu0 0.0
        %356 = vmatpush1.xpose.msra.mxu0 0.0
        %357 = vmatprep.subr.mxu0 0.0
        %358 = vmatpush1.xpose.msra.mxu0 0.0
        %359 = vmatprep.subr.mxu0 0.0
        %360 = vmatpush1.xpose.msra.mxu0 0.0
        %361 = vmatprep.subr.mxu0 0.0
        %362 = vmatpush1.xpose.msra.mxu0 0.0
        %363 = vmatprep.subr.mxu0 0.0
        %364 = vmatpush1.xpose.msra.mxu0 0.0
        %365 = vmatprep.subr.mxu0 0.0
        %366 = vmatpush1.xpose.msra.mxu0 0.0
        %367 = vmatprep.subr.mxu0 0.0
        %368 = vmatpush1.xpose.msra.mxu0 0.0
        %369 = vmatprep.subr.mxu0 0.0
        %370 = vmatpush1.xpose.msra.mxu0 0.0
        %371 = vmatprep.subr.mxu0 0.0
        %372 = vmatpush1.xpose.msra.mxu0 0.0
        %373 = vmatprep.subr.mxu0 0.0
        %374 = vmatpush1.xpose.msra.mxu0 0.0
        %375 = vmatprep.subr.mxu0 0.0
        %376 = vmatpush1.xpose.msra.mxu0 0.0
        %377 = vmatprep.subr.mxu0 0.0
        %378 = vmatpush1.xpose.msra.mxu0 0.0
        %379 = vmatprep.subr.mxu0 0.0
        %380 = vmatpush1.xpose.msra.mxu0 0.0
        %381 = vmatprep.subr.mxu0 0.0
        %382 = vmatpush1.xpose.msra.mxu0 0.0
        %383 = vmatprep.subr.mxu0 0.0
        %384 = vmatpush1.xpose.msra.mxu0 0.0
        %385 = vmatprep.subr.mxu0 0.0
        %386 = vmatpush1.xpose.msra.mxu0 0.0
        %387 = vmatprep.subr.mxu0 0.0
        %388 = vmatpush1.xpose.msra.mxu0 0.0
        %389 = vmatprep.subr.mxu0 0.0
        %390 = vmatpush1.xpose.msra.mxu0 0.0
        %391 = vmatprep.subr.mxu0 0.0
        %392 = vmatpush1.xpose.msra.mxu0 0.0
        %393 = vmatprep.subr.mxu0 0.0
        %394 = vmatpush1.xpose.msra.mxu0 0.0
        %395 = vmatprep.subr.mxu0 0.0
        %396 = vmatpush1.xpose.msra.mxu0 0.0
        %397 = vmatprep.subr.mxu0 0.0
        %398 = vmatpush1.xpose.msra.mxu0 0.0
        %399 = vmatprep.mubr.f32.mxu0 0.0
        %400 = vmatmul.mubr.f32.gmra.mrb[0].mxu0 %v331
        %v401 = vpop.f32.mrb[0].mxu0
        %v402 = vadd.f32 %v326, %v401
        %v403 = vpop.f32.mrb[0].mxu0
        %404 = vdwg.mxu0
        %v405 = vsel %vm330, %v402, -inf
        %406 = vmax.xlane.f32.xlu0 %v405
        %v407 = vpop.xlane.xlu0 %406
        %v408 = vsub.f32 %v402, %v407
        %v409 = vmul.f32 %v408, 1.442695
        %v410 = vpow.pop %v409
        %v411 = vsel %vm330, %v410, 0.0
        %412 = vadd.xlane.f32.xlu0 %v411
        %v413 = vpop.xlane.xlu0 %412
        %v414 = vrcp.pop %v413
        %v415 = vmul.f32 %v410, %v414
        %416 = vrot.lane.b32.xlu0 %v318, 64
        %v417 = vpop.permute.xlu0 %416
        %v420 = vsel %vm330, %v415, 0
        %422 = vmatprep.subr.mxu0 0.0
        %423 = vmatpush1.msra.mxu0 %v417
        %424 = vmatprep.subr.mxu0 0.0
        %425 = vmatpush1.msra.mxu0 0.0
        %426 = vmatprep.subr.mxu0 0.0
        %427 = vmatpush1.msra.mxu0 0.0
        %428 = vmatprep.subr.mxu0 0.0
        %429 = vmatpush1.msra.mxu0 0.0
        %430 = vmatprep.subr.mxu0 0.0
        %431 = vmatpush1.msra.mxu0 0.0
        %432 = vmatprep.subr.mxu0 0.0
        %433 = vmatpush1.msra.mxu0 0.0
        %434 = vmatprep.subr.mxu0 0.0
        %435 = vmatpush1.msra.mxu0 0.0
        %436 = vmatprep.subr.mxu0 0.0
        %437 = vmatpush1.msra.mxu0 0.0
        %438 = vmatprep.subr.mxu0 0.0
        %439 = vmatpush1.msra.mxu0 0.0
        %440 = vmatprep.subr.mxu0 0.0
        %441 = vmatpush1.msra.mxu0 0.0
        %442 = vmatprep.subr.mxu0 0.0
        %443 = vmatpush1.msra.mxu0 0.0
        %444 = vmatprep.subr.mxu0 0.0
        %445 = vmatpush1.msra.mxu0 0.0
        %446 = vmatprep.subr.mxu0 0.0
        %447 = vmatpush1.msra.mxu0 0.0
        %448 = vmatprep.subr.mxu0 0.0
        %449 = vmatpush1.msra.mxu0 0.0
        %450 = vmatprep.subr.mxu0 0.0
        %451 = vmatpush1.msra.mxu0 0.0
        %452 = vmatprep.subr.mxu0 0.0
        %453 = vmatpush1.msra.mxu0 0.0
        %454 = vmatprep.subr.mxu0 0.0
        %455 = vmatpush1.msra.mxu0 0.0
        %456 = vmatprep.subr.mxu0 0.0
        %457 = vmatpush1.msra.mxu0 0.0
        %458 = vmatprep.subr.mxu0 0.0
        %459 = vmatpush1.msra.mxu0 0.0
        %460 = vmatprep.subr.mxu0 0.0
        %461 = vmatpush1.msra.mxu0 0.0
        %462 = vmatprep.subr.mxu0 0.0
        %463 = vmatpush1.msra.mxu0 0.0
        %464 = vmatprep.subr.mxu0 0.0
        %465 = vmatpush1.msra.mxu0 0.0
        %466 = vmatprep.subr.mxu0 0.0
        %467 = vmatpush1.msra.mxu0 0.0
        %468 = vmatprep.subr.mxu0 0.0
        %469 = vmatpush1.msra.mxu0 0.0
        %470 = vmatprep.subr.mxu0 0.0
        %471 = vmatpush1.msra.mxu0 0.0
        %472 = vmatprep.subr.mxu0 0.0
        %473 = vmatpush1.msra.mxu0 0.0
        %474 = vmatprep.subr.mxu0 0.0
        %475 = vmatpush1.msra.mxu0 0.0
        %476 = vmatprep.subr.mxu0 0.0
        %477 = vmatpush1.msra.mxu0 0.0
        %478 = vmatprep.subr.mxu0 0.0
        %479 = vmatpush1.msra.mxu0 0.0
        %480 = vmatprep.subr.mxu0 0.0
        %481 = vmatpush1.msra.mxu0 0.0
        %482 = vmatprep.subr.mxu0 0.0
        %483 = vmatpush1.msra.mxu0 0.0
        %484 = vmatprep.subr.mxu0 0.0
        %485 = vmatpush1.msra.mxu0 0.0
        %486 = vmatprep.mubr.f32.mxu0 0.0
        %487 = vmatmul.mubr.f32.gmra.mrb[0].mxu0 %v420
        %v488 = vpop.f32.mrb[0].mxu0
        %v489 = vadd.f32 0.0, %v488
        %v490 = vpop.f32.mrb[0].mxu0
        %491 = vdwg.mxu0
        %492 = vrot.lane.b32.xlu0 %v318, 120
        %v493 = vpop.permute.xlu0 %492
        %494 = vrot.lane.b32.xlu0 %v318, 88
        %v495 = vpop.permute.xlu0 %494
        %v496 = vsel %vm330, %v493, 0
        %v498 = vsel %vm330, %v495, 0
        %500 = vmatprep.subr.mxu0 0.0
        %501 = vmatpush1.xpose.msra.mxu0 %v498
        %502 = vmatprep.subr.mxu0 0.0
        %503 = vmatpush1.xpose.msra.mxu0 0.0
        %504 = vmatprep.subr.mxu0 0.0
        %505 = vmatpush1.xpose.msra.mxu0 0.0
        %506 = vmatprep.subr.mxu0 0.0
        %507 = vmatpush1.xpose.msra.mxu0 0.0
        %508 = vmatprep.subr.mxu0 0.0
        %509 = vmatpush1.xpose.msra.mxu0 0.0
        %510 = vmatprep.subr.mxu0 0.0
        %511 = vmatpush1.xpose.msra.mxu0 0.0
        %512 = vmatprep.subr.mxu0 0.0
        %513 = vmatpush1.xpose.msra.mxu0 0.0
        %514 = vmatprep.subr.mxu0 0.0
        %515 = vmatpush1.xpose.msra.mxu0 0.0
        %516 = vmatprep.subr.mxu0 0.0
        %517 = vmatpush1.xpose.msra.mxu0 0.0
        %518 = vmatprep.subr.mxu0 0.0
        %519 = vmatpush1.xpose.msra.mxu0 0.0
        %520 = vmatprep.subr.mxu0 0.0
        %521 = vmatpush1.xpose.msra.mxu0 0.0
        %522 = vmatprep.subr.mxu0 0.0
        %523 = vmatpush1.xpose.msra.mxu0 0.0
        %524 = vmatprep.subr.mxu0 0.0
        %525 = vmatpush1.xpose.msra.mxu0 0.0
        %526 = vmatprep.subr.mxu0 0.0
        %527 = vmatpush1.xpose.msra.mxu0 0.0
        %528 = vmatprep.subr.mxu0 0.0
        %529 = vmatpush1.xpose.msra.mxu0 0.0
        %530 = vmatprep.subr.mxu0 0.0
        %531 = vmatpush1.xpose.msra.mxu0 0.0
        %532 = vmatprep.subr.mxu0 0.0
        %533 = vmatpush1.xpose.msra.mxu0 0.0
        %534 = vmatprep.subr.mxu0 0.0
        %535 = vmatpush1.xpose.msra.mxu0 0.0
        %536 = vmatprep.subr.mxu0 0.0
        %537 = vmatpush1.xpose.msra.mxu0 0.0
        %538 = vmatprep.subr.mxu0 0.0
        %539 = vmatpush1.xpose.msra.mxu0 0.0
        %540 = vmatprep.subr.mxu0 0.0
        %541 = vmatpush1.xpose.msra.mxu0 0.0
        %542 = vmatprep.subr.mxu0 0.0
        %543 = vmatpush1.xpose.msra.mxu0 0.0
        %544 = vmatprep.subr.mxu0 0.0
        %545 = vmatpush1.xpose.msra.mxu0 0.0
        %546 = vmatprep.subr.mxu0 0.0
        %547 = vmatpush1.xpose.msra.mxu0 0.0
        %548 = vmatprep.subr.mxu0 0.0
        %549 = vmatpush1.xpose.msra.mxu0 0.0
        %550 = vmatprep.subr.mxu0 0.0
        %551 = vmatpush1.xpose.msra.mxu0 0.0
        %552 = vmatprep.subr.mxu0 0.0
        %553 = vmatpush1.xpose.msra.mxu0 0.0
        %554 = vmatprep.subr.mxu0 0.0
        %555 = vmatpush1.xpose.msra.mxu0 0.0
        %556 = vmatprep.subr.mxu0 0.0
        %557 = vmatpush1.xpose.msra.mxu0 0.0
        %558 = vmatprep.subr.mxu0 0.0
        %559 = vmatpush1.xpose.msra.mxu0 0.0
        %560 = vmatprep.subr.mxu0 0.0
        %561 = vmatpush1.xpose.msra.mxu0 0.0
        %562 = vmatprep.subr.mxu0 0.0
        %563 = vmatpush1.xpose.msra.mxu0 0.0
        %564 = vmatprep.mubr.f32.mxu0 0.0
        %565 = vmatmul.mubr.f32.gmra.mrb[0].mxu0 %v496
        %v566 = vpop.f32.mrb[0].mxu0
        %v567 = vadd.f32 %v326, %v566
        %v568 = vpop.f32.mrb[0].mxu0
        %569 = vdwg.mxu0
        %v570 = vsel %vm330, %v567, -inf
        %571 = vmax.xlane.f32.xlu0 %v570
        %v572 = vpop.xlane.xlu0 %571
        %v573 = vsub.f32 %v567, %v572
        %v574 = vmul.f32 %v573, 1.442695
        %v575 = vpow.pop %v574
        %v576 = vsel %vm330, %v575, 0.0
        %577 = vadd.xlane.f32.xlu0 %v576
        %v578 = vpop.xlane.xlu0 %577
        %v579 = vrcp.pop %v578
        %v580 = vmul.f32 %v575, %v579
        %581 = vrot.lane.b32.xlu0 %v318, 56
        %v582 = vpop.permute.xlu0 %581
        %v585 = vsel %vm330, %v580, 0
        %587 = vmatprep.subr.mxu0 0.0
        %588 = vmatpush1.msra.mxu0 %v582
        %589 = vmatprep.subr.mxu0 0.0
        %590 = vmatpush1.msra.mxu0 0.0
        %591 = vmatprep.subr.mxu0 0.0
        %592 = vmatpush1.msra.mxu0 0.0
        %593 = vmatprep.subr.mxu0 0.0
        %594 = vmatpush1.msra.mxu0 0.0
        %595 = vmatprep.subr.mxu0 0.0
        %596 = vmatpush1.msra.mxu0 0.0
        %597 = vmatprep.subr.mxu0 0.0
        %598 = vmatpush1.msra.mxu0 0.0
        %599 = vmatprep.subr.mxu0 0.0
        %600 = vmatpush1.msra.mxu0 0.0
        %601 = vmatprep.subr.mxu0 0.0
        %602 = vmatpush1.msra.mxu0 0.0
        %603 = vmatprep.subr.mxu0 0.0
        %604 = vmatpush1.msra.mxu0 0.0
        %605 = vmatprep.subr.mxu0 0.0
        %606 = vmatpush1.msra.mxu0 0.0
        %607 = vmatprep.subr.mxu0 0.0
        %608 = vmatpush1.msra.mxu0 0.0
        %609 = vmatprep.subr.mxu0 0.0
        %610 = vmatpush1.msra.mxu0 0.0
        %611 = vmatprep.subr.mxu0 0.0
        %612 = vmatpush1.msra.mxu0 0.0
        %613 = vmatprep.subr.mxu0 0.0
        %614 = vmatpush1.msra.mxu0 0.0
        %615 = vmatprep.subr.mxu0 0.0
        %616 = vmatpush1.msra.mxu0 0.0
        %617 = vmatprep.subr.mxu0 0.0
        %618 = vmatpush1.msra.mxu0 0.0
        %619 = vmatprep.subr.mxu0 0.0
        %620 = vmatpush1.msra.mxu0 0.0
        %621 = vmatprep.subr.mxu0 0.0
        %622 = vmatpush1.msra.mxu0 0.0
        %623 = vmatprep.subr.mxu0 0.0
        %624 = vmatpush1.msra.mxu0 0.0
        %625 = vmatprep.subr.mxu0 0.0
        %626 = vmatpush1.msra.mxu0 0.0
        %627 = vmatprep.subr.mxu0 0.0
        %628 = vmatpush1.msra.mxu0 0.0
        %629 = vmatprep.subr.mxu0 0.0
        %630 = vmatpush1.msra.mxu0 0.0
        %631 = vmatprep.subr.mxu0 0.0
        %632 = vmatpush1.msra.mxu0 0.0
        %633 = vmatprep.subr.mxu0 0.0
        %634 = vmatpush1.msra.mxu0 0.0
        %635 = vmatprep.subr.mxu0 0.0
        %636 = vmatpush1.msra.mxu0 0.0
        %637 = vmatprep.subr.mxu0 0.0
        %638 = vmatpush1.msra.mxu0 0.0
        %639 = vmatprep.subr.mxu0 0.0
        %640 = vmatpush1.msra.mxu0 0.0
        %641 = vmatprep.subr.mxu0 0.0
        %642 = vmatpush1.msra.mxu0 0.0
        %643 = vmatprep.subr.mxu0 0.0
        %644 = vmatpush1.msra.mxu0 0.0
        %645 = vmatprep.subr.mxu0 0.0
        %646 = vmatpush1.msra.mxu0 0.0
        %647 = vmatprep.subr.mxu0 0.0
        %648 = vmatpush1.msra.mxu0 0.0
        %649 = vmatprep.subr.mxu0 0.0
        %650 = vmatpush1.msra.mxu0 0.0
        %651 = vmatprep.mubr.f32.mxu0 0.0
        %652 = vmatmul.mubr.f32.gmra.mrb[0].mxu0 %v585
        %v653 = vpop.f32.mrb[0].mxu0
        %v654 = vadd.f32 0.0, %v653
        %v655 = vpop.f32.mrb[0].mxu0
        %656 = vdwg.mxu0
        %657 = vrot.lane.b32.xlu0 %v318, 112
        %v658 = vpop.permute.xlu0 %657
        %659 = vrot.lane.b32.xlu0 %v318, 80
        %v660 = vpop.permute.xlu0 %659
        %v661 = vsel %vm330, %v658, 0
        %v663 = vsel %vm330, %v660, 0
        %665 = vmatprep.subr.mxu0 0.0
        %666 = vmatpush1.xpose.msra.mxu0 %v663
        %667 = vmatprep.subr.mxu0 0.0
        %668 = vmatpush1.xpose.msra.mxu0 0.0
        %669 = vmatprep.subr.mxu0 0.0
        %670 = vmatpush1.xpose.msra.mxu0 0.0
        %671 = vmatprep.subr.mxu0 0.0
        %672 = vmatpush1.xpose.msra.mxu0 0.0
        %673 = vmatprep.subr.mxu0 0.0
        %674 = vmatpush1.xpose.msra.mxu0 0.0
        %675 = vmatprep.subr.mxu0 0.0
        %676 = vmatpush1.xpose.msra.mxu0 0.0
        %677 = vmatprep.subr.mxu0 0.0
        %678 = vmatpush1.xpose.msra.mxu0 0.0
        %679 = vmatprep.subr.mxu0 0.0
        %680 = vmatpush1.xpose.msra.mxu0 0.0
        %681 = vmatprep.subr.mxu0 0.0
        %682 = vmatpush1.xpose.msra.mxu0 0.0
        %683 = vmatprep.subr.mxu0 0.0
        %684 = vmatpush1.xpose.msra.mxu0 0.0
        %685 = vmatprep.subr.mxu0 0.0
        %686 = vmatpush1.xpose.msra.mxu0 0.0
        %687 = vmatprep.subr.mxu0 0.0
        %688 = vmatpush1.xpose.msra.mxu0 0.0
        %689 = vmatprep.subr.mxu0 0.0
        %690 = vmatpush1.xpose.msra.mxu0 0.0
        %691 = vmatprep.subr.mxu0 0.0
        %692 = vmatpush1.xpose.msra.mxu0 0.0
        %693 = vmatprep.subr.mxu0 0.0
        %694 = vmatpush1.xpose.msra.mxu0 0.0
        %695 = vmatprep.subr.mxu0 0.0
        %696 = vmatpush1.xpose.msra.mxu0 0.0
        %697 = vmatprep.subr.mxu0 0.0
        %698 = vmatpush1.xpose.msra.mxu0 0.0
        %699 = vmatprep.subr.mxu0 0.0
        %700 = vmatpush1.xpose.msra.mxu0 0.0
        %701 = vmatprep.subr.mxu0 0.0
        %702 = vmatpush1.xpose.msra.mxu0 0.0
        %703 = vmatprep.subr.mxu0 0.0
        %704 = vmatpush1.xpose.msra.mxu0 0.0
        %705 = vmatprep.subr.mxu0 0.0
        %706 = vmatpush1.xpose.msra.mxu0 0.0
        %707 = vmatprep.subr.mxu0 0.0
        %708 = vmatpush1.xpose.msra.mxu0 0.0
        %709 = vmatprep.subr.mxu0 0.0
        %710 = vmatpush1.xpose.msra.mxu0 0.0
        %711 = vmatprep.subr.mxu0 0.0
        %712 = vmatpush1.xpose.msra.mxu0 0.0
        %713 = vmatprep.subr.mxu0 0.0
        %714 = vmatpush1.xpose.msra.mxu0 0.0
        %715 = vmatprep.subr.mxu0 0.0
        %716 = vmatpush1.xpose.msra.mxu0 0.0
        %717 = vmatprep.subr.mxu0 0.0
        %718 = vmatpush1.xpose.msra.mxu0 0.0
        %719 = vmatprep.subr.mxu0 0.0
        %720 = vmatpush1.xpose.msra.mxu0 0.0
        %721 = vmatprep.subr.mxu0 0.0
        %722 = vmatpush1.xpose.msra.mxu0 0.0
        %723 = vmatprep.subr.mxu0 0.0
        %724 = vmatpush1.xpose.msra.mxu0 0.0
        %725 = vmatprep.subr.mxu0 0.0
        %726 = vmatpush1.xpose.msra.mxu0 0.0
        %727 = vmatprep.subr.mxu0 0.0
        %728 = vmatpush1.xpose.msra.mxu0 0.0
        %729 = vmatprep.mubr.f32.mxu0 0.0
        %730 = vmatmul.mubr.f32.gmra.mrb[0].mxu0 %v661
        %v731 = vpop.f32.mrb[0].mxu0
        %v732 = vadd.f32 %v326, %v731
        %v733 = vpop.f32.mrb[0].mxu0
        %734 = vdwg.mxu0
        %v735 = vsel %vm330, %v732, -inf
        %736 = vmax.xlane.f32.xlu0 %v735
        %v737 = vpop.xlane.xlu0 %736
        %v738 = vsub.f32 %v732, %v737
        %v739 = vmul.f32 %v738, 1.442695
        %v740 = vpow.pop %v739
        %v741 = vsel %vm330, %v740, 0.0
        %742 = vadd.xlane.f32.xlu0 %v741
        %v743 = vpop.xlane.xlu0 %742
        %v744 = vrcp.pop %v743
        %v745 = vmul.f32 %v740, %v744
        %746 = vrot.lane.b32.xlu0 %v318, 48
        %v747 = vpop.permute.xlu0 %746
        %v750 = vsel %vm330, %v745, 0
        %752 = vmatprep.subr.mxu0 0.0
        %753 = vmatpush1.msra.mxu0 %v747
        %754 = vmatprep.subr.mxu0 0.0
        %755 = vmatpush1.msra.mxu0 0.0
        %756 = vmatprep.subr.mxu0 0.0
        %757 = vmatpush1.msra.mxu0 0.0
        %758 = vmatprep.subr.mxu0 0.0
        %759 = vmatpush1.msra.mxu0 0.0
        %760 = vmatprep.subr.mxu0 0.0
        %761 = vmatpush1.msra.mxu0 0.0
        %762 = vmatprep.subr.mxu0 0.0
        %763 = vmatpush1.msra.mxu0 0.0
        %764 = vmatprep.subr.mxu0 0.0
        %765 = vmatpush1.msra.mxu0 0.0
        %766 = vmatprep.subr.mxu0 0.0
        %767 = vmatpush1.msra.mxu0 0.0
        %768 = vmatprep.subr.mxu0 0.0
        %769 = vmatpush1.msra.mxu0 0.0
        %770 = vmatprep.subr.mxu0 0.0
        %771 = vmatpush1.msra.mxu0 0.0
        %772 = vmatprep.subr.mxu0 0.0
        %773 = vmatpush1.msra.mxu0 0.0
        %774 = vmatprep.subr.mxu0 0.0
        %775 = vmatpush1.msra.mxu0 0.0
        %776 = vmatprep.subr.mxu0 0.0
        %777 = vmatpush1.msra.mxu0 0.0
        %778 = vmatprep.subr.mxu0 0.0
        %779 = vmatpush1.msra.mxu0 0.0
        %780 = vmatprep.subr.mxu0 0.0
        %781 = vmatpush1.msra.mxu0 0.0
        %782 = vmatprep.subr.mxu0 0.0
        %783 = vmatpush1.msra.mxu0 0.0
        %784 = vmatprep.subr.mxu0 0.0
        %785 = vmatpush1.msra.mxu0 0.0
        %786 = vmatprep.subr.mxu0 0.0
        %787 = vmatpush1.msra.mxu0 0.0
        %788 = vmatprep.subr.mxu0 0.0
        %789 = vmatpush1.msra.mxu0 0.0
        %790 = vmatprep.subr.mxu0 0.0
        %791 = vmatpush1.msra.mxu0 0.0
        %792 = vmatprep.subr.mxu0 0.0
        %793 = vmatpush1.msra.mxu0 0.0
        %794 = vmatprep.subr.mxu0 0.0
        %795 = vmatpush1.msra.mxu0 0.0
        %796 = vmatprep.subr.mxu0 0.0
        %797 = vmatpush1.msra.mxu0 0.0
        %798 = vmatprep.subr.mxu0 0.0
        %799 = vmatpush1.msra.mxu0 0.0
        %800 = vmatprep.subr.mxu0 0.0
        %801 = vmatpush1.msra.mxu0 0.0
        %802 = vmatprep.subr.mxu0 0.0
        %803 = vmatpush1.msra.mxu0 0.0
        %804 = vmatprep.subr.mxu0 0.0
        %805 = vmatpush1.msra.mxu0 0.0
        %806 = vmatprep.subr.mxu0 0.0
        %807 = vmatpush1.msra.mxu0 0.0
        %808 = vmatprep.subr.mxu0 0.0
        %809 = vmatpush1.msra.mxu0 0.0
        %810 = vmatprep.subr.mxu0 0.0
        %811 = vmatpush1.msra.mxu0 0.0
        %812 = vmatprep.subr.mxu0 0.0
        %813 = vmatpush1.msra.mxu0 0.0
        %814 = vmatprep.subr.mxu0 0.0
        %815 = vmatpush1.msra.mxu0 0.0
        %816 = vmatprep.mubr.f32.mxu0 0.0
        %817 = vmatmul.mubr.f32.gmra.mrb[0].mxu0 %v750
        %v818 = vpop.f32.mrb[0].mxu0
        %v819 = vadd.f32 0.0, %v818
        %v820 = vpop.f32.mrb[0].mxu0
        %821 = vdwg.mxu0
        %822 = vrot.lane.b32.xlu0 %v318, 104
        %v823 = vpop.permute.xlu0 %822
        %824 = vrot.lane.b32.xlu0 %v318, 72
        %v825 = vpop.permute.xlu0 %824
        %v826 = vsel %vm330, %v823, 0
        %v828 = vsel %vm330, %v825, 0
        %830 = vmatprep.subr.mxu0 0.0
        %831 = vmatpush1.xpose.msra.mxu0 %v828
        %832 = vmatprep.subr.mxu0 0.0
        %833 = vmatpush1.xpose.msra.mxu0 0.0
        %834 = vmatprep.subr.mxu0 0.0
        %835 = vmatpush1.xpose.msra.mxu0 0.0
        %836 = vmatprep.subr.mxu0 0.0
        %837 = vmatpush1.xpose.msra.mxu0 0.0
        %838 = vmatprep.subr.mxu0 0.0
        %839 = vmatpush1.xpose.msra.mxu0 0.0
        %840 = vmatprep.subr.mxu0 0.0
        %841 = vmatpush1.xpose.msra.mxu0 0.0
        %842 = vmatprep.subr.mxu0 0.0
        %843 = vmatpush1.xpose.msra.mxu0 0.0
        %844 = vmatprep.subr.mxu0 0.0
        %845 = vmatpush1.xpose.msra.mxu0 0.0
        %846 = vmatprep.subr.mxu0 0.0
        %847 = vmatpush1.xpose.msra.mxu0 0.0
        %848 = vmatprep.subr.mxu0 0.0
        %849 = vmatpush1.xpose.msra.mxu0 0.0
        %850 = vmatprep.subr.mxu0 0.0
        %851 = vmatpush1.xpose.msra.mxu0 0.0
        %852 = vmatprep.subr.mxu0 0.0
        %853 = vmatpush1.xpose.msra.mxu0 0.0
        %854 = vmatprep.subr.mxu0 0.0
        %855 = vmatpush1.xpose.msra.mxu0 0.0
        %856 = vmatprep.subr.mxu0 0.0
        %857 = vmatpush1.xpose.msra.mxu0 0.0
        %858 = vmatprep.subr.mxu0 0.0
        %859 = vmatpush1.xpose.msra.mxu0 0.0
        %860 = vmatprep.subr.mxu0 0.0
        %861 = vmatpush1.xpose.msra.mxu0 0.0
        %862 = vmatprep.subr.mxu0 0.0
        %863 = vmatpush1.xpose.msra.mxu0 0.0
        %864 = vmatprep.subr.mxu0 0.0
        %865 = vmatpush1.xpose.msra.mxu0 0.0
        %866 = vmatprep.subr.mxu0 0.0
        %867 = vmatpush1.xpose.msra.mxu0 0.0
        %868 = vmatprep.subr.mxu0 0.0
        %869 = vmatpush1.xpose.msra.mxu0 0.0
        %870 = vmatprep.subr.mxu0 0.0
        %871 = vmatpush1.xpose.msra.mxu0 0.0
        %872 = vmatprep.subr.mxu0 0.0
        %873 = vmatpush1.xpose.msra.mxu0 0.0
        %874 = vmatprep.subr.mxu0 0.0
        %875 = vmatpush1.xpose.msra.mxu0 0.0
        %876 = vmatprep.subr.mxu0 0.0
        %877 = vmatpush1.xpose.msra.mxu0 0.0
        %878 = vmatprep.subr.mxu0 0.0
        %879 = vmatpush1.xpose.msra.mxu0 0.0
        %880 = vmatprep.subr.mxu0 0.0
        %881 = vmatpush1.xpose.msra.mxu0 0.0
        %882 = vmatprep.subr.mxu0 0.0
        %883 = vmatpush1.xpose.msra.mxu0 0.0
        %884 = vmatprep.subr.mxu0 0.0
        %885 = vmatpush1.xpose.msra.mxu0 0.0
        %886 = vmatprep.subr.mxu0 0.0
        %887 = vmatpush1.xpose.msra.mxu0 0.0
        %888 = vmatprep.subr.mxu0 0.0
        %889 = vmatpush1.xpose.msra.mxu0 0.0
        %890 = vmatprep.subr.mxu0 0.0
        %891 = vmatpush1.xpose.msra.mxu0 0.0
        %892 = vmatprep.subr.mxu0 0.0
        %893 = vmatpush1.xpose.msra.mxu0 0.0
        %894 = vmatprep.mubr.f32.mxu0 0.0
        %895 = vmatmul.mubr.f32.gmra.mrb[0].mxu0 %v826
        %v896 = vpop.f32.mrb[0].mxu0
        %v897 = vadd.f32 %v326, %v896
        %v898 = vpop.f32.mrb[0].mxu0
        %899 = vdwg.mxu0
        %v900 = vsel %vm330, %v897, -inf
        %901 = vmax.xlane.f32.xlu0 %v900
        %v902 = vpop.xlane.xlu0 %901
        %v903 = vsub.f32 %v897, %v902
        %v904 = vmul.f32 %v903, 1.442695
        %v905 = vpow.pop %v904
        %v906 = vsel %vm330, %v905, 0.0
        %907 = vadd.xlane.f32.xlu0 %v906
        %v908 = vpop.xlane.xlu0 %907
        %v909 = vrcp.pop %v908
        %v910 = vmul.f32 %v905, %v909
        %911 = vrot.lane.b32.xlu0 %v318, 40
        %v912 = vpop.permute.xlu0 %911
        %v915 = vsel %vm330, %v910, 0
        %917 = vmatprep.subr.mxu0 0.0
        %918 = vmatpush1.msra.mxu0 %v912
        %919 = vmatprep.subr.mxu0 0.0
        %920 = vmatpush1.msra.mxu0 0.0
        %921 = vmatprep.subr.mxu0 0.0
        %922 = vmatpush1.msra.mxu0 0.0
        %923 = vmatprep.subr.mxu0 0.0
        %924 = vmatpush1.msra.mxu0 0.0
        %925 = vmatprep.subr.mxu0 0.0
        %926 = vmatpush1.msra.mxu0 0.0
        %927 = vmatprep.subr.mxu0 0.0
        %928 = vmatpush1.msra.mxu0 0.0
        %929 = vmatprep.subr.mxu0 0.0
        %930 = vmatpush1.msra.mxu0 0.0
        %931 = vmatprep.subr.mxu0 0.0
        %932 = vmatpush1.msra.mxu0 0.0
        %933 = vmatprep.subr.mxu0 0.0
        %934 = vmatpush1.msra.mxu0 0.0
        %935 = vmatprep.subr.mxu0 0.0
        %936 = vmatpush1.msra.mxu0 0.0
        %937 = vmatprep.subr.mxu0 0.0
        %938 = vmatpush1.msra.mxu0 0.0
        %939 = vmatprep.subr.mxu0 0.0
        %940 = vmatpush1.msra.mxu0 0.0
        %941 = vmatprep.subr.mxu0 0.0
        %942 = vmatpush1.msra.mxu0 0.0
        %943 = vmatprep.subr.mxu0 0.0
        %944 = vmatpush1.msra.mxu0 0.0
        %945 = vmatprep.subr.mxu0 0.0
        %946 = vmatpush1.msra.mxu0 0.0
        %947 = vmatprep.subr.mxu0 0.0
        %948 = vmatpush1.msra.mxu0 0.0
        %949 = vmatprep.subr.mxu0 0.0
        %950 = vmatpush1.msra.mxu0 0.0
        %951 = vmatprep.subr.mxu0 0.0
        %952 = vmatpush1.msra.mxu0 0.0
        %953 = vmatprep.subr.mxu0 0.0
        %954 = vmatpush1.msra.mxu0 0.0
        %955 = vmatprep.subr.mxu0 0.0
        %956 = vmatpush1.msra.mxu0 0.0
        %957 = vmatprep.subr.mxu0 0.0
        %958 = vmatpush1.msra.mxu0 0.0
        %959 = vmatprep.subr.mxu0 0.0
        %960 = vmatpush1.msra.mxu0 0.0
        %961 = vmatprep.subr.mxu0 0.0
        %962 = vmatpush1.msra.mxu0 0.0
        %963 = vmatprep.subr.mxu0 0.0
        %964 = vmatpush1.msra.mxu0 0.0
        %965 = vmatprep.subr.mxu0 0.0
        %966 = vmatpush1.msra.mxu0 0.0
        %967 = vmatprep.subr.mxu0 0.0
        %968 = vmatpush1.msra.mxu0 0.0
        %969 = vmatprep.subr.mxu0 0.0
        %970 = vmatpush1.msra.mxu0 0.0
        %971 = vmatprep.subr.mxu0 0.0
        %972 = vmatpush1.msra.mxu0 0.0
        %973 = vmatprep.subr.mxu0 0.0
        %974 = vmatpush1.msra.mxu0 0.0
        %975 = vmatprep.subr.mxu0 0.0
        %976 = vmatpush1.msra.mxu0 0.0
        %977 = vmatprep.subr.mxu0 0.0
        %978 = vmatpush1.msra.mxu0 0.0
        %979 = vmatprep.subr.mxu0 0.0
        %980 = vmatpush1.msra.mxu0 0.0
        %981 = vmatprep.mubr.f32.mxu0 0.0
        %982 = vmatmul.mubr.f32.gmra.mrb[0].mxu0 %v915
        %v983 = vpop.f32.mrb[0].mxu0
        %v984 = vadd.f32 0.0, %v983
        %v985 = vpop.f32.mrb[0].mxu0
        %986 = vdwg.mxu0
        %988 = vrot.lane.b32.xlu0 %v654, 8
        %v989 = vpop.permute.xlu0 %988
        %992 = vrot.lane.b32.xlu0 %v819, 16
        %v993 = vpop.permute.xlu0 %992
        %996 = vrot.lane.b32.xlu0 %v984, 24
        %v997 = vpop.permute.xlu0 %996
        %v999 = vsel %vm330, %v489, %v989
        %vm1000 = vcmask 130048
        %v1001 = vsel %vm1000, %v999, %v993
        %vm1002 = vcmask 195584
        %v1003 = vsel %vm1002, %v1001, %v997
        %v1004 = vld [vmem:[#allocation7] sm:$0xff]
        %v1005 = vld [vmem:[#allocation7 + $0x8] sm:$0xff]
        %v1006 = vld [vmem:[#allocation7 + $0x10] sm:$0xff]
        %v1007 = vld [vmem:[#allocation7 + $0x18] sm:$0xff]
        %v1008 = vld [vmem:[%s3] sm:$0x1]
        %v1010 = vlaneseq
        %v1011 = vshrl.u32 %v1010, 7
        %v1012 = vsub.s32 0, %v1011
        %v1013 = vrot.slane %v1008, %v1012
        %v1016 = vsel %vm247, %v1003, 0
        %1018 = vmatprep.subr.mxu0 0.0
        %1019 = vmatpush1.msra.mxu0 %v1004
        %1020 = vmatprep.subr.mxu0 0.0
        %1021 = vmatpush1.msra.mxu0 %v1005
        %1022 = vmatprep.subr.mxu0 0.0
        %1023 = vmatpush1.msra.mxu0 %v1006
        %1024 = vmatprep.subr.mxu0 0.0
        %1025 = vmatpush1.msra.mxu0 %v1007
        %1026 = vmatprep.subr.mxu0 0.0
        %1027 = vmatpush1.msra.mxu0 0.0
        %1028 = vmatprep.subr.mxu0 0.0
        %1029 = vmatpush1.msra.mxu0 0.0
        %1030 = vmatprep.subr.mxu0 0.0
        %1031 = vmatpush1.msra.mxu0 0.0
        %1032 = vmatprep.subr.mxu0 0.0
        %1033 = vmatpush1.msra.mxu0 0.0
        %1034 = vmatprep.subr.mxu0 0.0
        %1035 = vmatpush1.msra.mxu0 0.0
        %1036 = vmatprep.subr.mxu0 0.0
        %1037 = vmatpush1.msra.mxu0 0.0
        %1038 = vmatprep.subr.mxu0 0.0
        %1039 = vmatpush1.msra.mxu0 0.0
        %1040 = vmatprep.subr.mxu0 0.0
        %1041 = vmatpush1.msra.mxu0 0.0
        %1042 = vmatprep.subr.mxu0 0.0
        %1043 = vmatpush1.msra.mxu0 0.0
        %1044 = vmatprep.subr.mxu0 0.0
        %1045 = vmatpush1.msra.mxu0 0.0
        %1046 = vmatprep.subr.mxu0 0.0
        %1047 = vmatpush1.msra.mxu0 0.0
        %1048 = vmatprep.subr.mxu0 0.0
        %1049 = vmatpush1.msra.mxu0 0.0
        %1050 = vmatprep.subr.mxu0 0.0
        %1051 = vmatpush1.msra.mxu0 0.0
        %1052 = vmatprep.subr.mxu0 0.0
        %1053 = vmatpush1.msra.mxu0 0.0
        %1054 = vmatprep.subr.mxu0 0.0
        %1055 = vmatpush1.msra.mxu0 0.0
        %1056 = vmatprep.subr.mxu0 0.0
        %1057 = vmatpush1.msra.mxu0 0.0
        %1058 = vmatprep.subr.mxu0 0.0
        %1059 = vmatpush1.msra.mxu0 0.0
        %1060 = vmatprep.subr.mxu0 0.0
        %1061 = vmatpush1.msra.mxu0 0.0
        %1062 = vmatprep.subr.mxu0 0.0
        %1063 = vmatpush1.msra.mxu0 0.0
        %1064 = vmatprep.subr.mxu0 0.0
        %1065 = vmatpush1.msra.mxu0 0.0
        %1066 = vmatprep.subr.mxu0 0.0
        %1067 = vmatpush1.msra.mxu0 0.0
        %1068 = vmatprep.subr.mxu0 0.0
        %1069 = vmatpush1.msra.mxu0 0.0
        %1070 = vmatprep.subr.mxu0 0.0
        %1071 = vmatpush1.msra.mxu0 0.0
        %1072 = vmatprep.subr.mxu0 0.0
        %1073 = vmatpush1.msra.mxu0 0.0
        %1074 = vmatprep.subr.mxu0 0.0
        %1075 = vmatpush1.msra.mxu0 0.0
        %1076 = vmatprep.subr.mxu0 0.0
        %1077 = vmatpush1.msra.mxu0 0.0
        %1078 = vmatprep.subr.mxu0 0.0
        %1079 = vmatpush1.msra.mxu0 0.0
        %1080 = vmatprep.subr.mxu0 0.0
        %1081 = vmatpush1.msra.mxu0 0.0
        %1082 = vmatprep.mubr.f32.mxu0 0.0
        %1083 = vmatmul.mubr.f32.gmra.mrb[0].mxu0 %v1016
        %v1084 = vpop.f32.mrb[0].mxu0
        %v1085 = vadd.f32 %v1013, %v1084
        %v1086 = vpop.f32.mrb[0].mxu0
        %1087 = vdwg.mxu0
        %1088 = vst.msk [vmem:[%s241] sm:$0xff] %vm247, %v1085
        %s1089 = sand.u32 %s119, 1
        %s1090 = scalar_lea.sflag [#allocation4], %s1089
        %s1091 = sand.u32 %s119, 1
        %s1092 = smul.addr %s1091, 8
        %s1093 = scalar_lea.vmem [#allocation8], %s1092
        // Predicated region
        $region49: #{tpu_custom_call.1} parent=35 // pred_check
          %p1094 = pneg %p129
        $region50: #{tpu_custom_call.1} parent=35 // pred_check_branch
          %1096 = sbr.rel (%p1094) target = $region52
        $region51: #{tpu_custom_call.1} parent=35 // pred_region
          %s1098 = ssub.s32 128, 128
          %1099 = vsyncadd %s1090, %s1098
          %s1100 = smul.addr %s22, 128
          %s1101 = scalar_lea.hbm %s4, %s1100
          %s1103 = sshll.u32 %s1093, 4
          %s1104 = int_to_ptr.vmem [resolvable:$true] %s1103
          %1106 = dma.vmem_to_hbm [thread:$0]  %s1104, 128, %s1101, %s1090
        $region52: #{tpu_custom_call.1} parent=35 // pred_fallthru
          _
      $region36: #{tpu_custom_call.1} parent=5 // pred_fallthru
        _
      %p1107 = scmp.le.s32.totalorder 2, %s17
      // Predicated region
      $region53: #{tpu_custom_call.1} parent=5 // pred_check
        %p1108 = pneg %p1107
      $region54: #{tpu_custom_call.1} parent=5 // pred_check_branch
        %1110 = sbr.rel (%p1108) target = $region56
      $region55: #{tpu_custom_call.1} parent=5 // pred_region
        %s1111 = ssub.s32 %s17, 2
        // Predicated region
        $region57: #{tpu_custom_call.1} parent=55 // pred_check
          %p1112 = pneg %p135
        $region58: #{tpu_custom_call.1} parent=55 // pred_check_branch
          %1114 = sbr.rel (%p1112) target = $region60
        $region59: #{tpu_custom_call.1} parent=55 // pred_region
          %s1115 = sand.u32 %s120, 1
          %s1116 = scalar_lea.sflag [#allocation4], %s1115
          %s1117 = sand.u32 %s120, 1
          %s1118 = smul.addr %s1117, 8
          %s1119 = scalar_lea.vmem [#allocation8], %s1118
          %1120 = dma.done %s1116, 128
        $region60: #{tpu_custom_call.1} parent=55 // pred_fallthru
          _
      $region56: #{tpu_custom_call.1} parent=5 // pred_fallthru
        _
    $region6: #{tpu_custom_call.1} parent=1 // loop_footer
      %s21 = sadd.s32 1, %s17
    $region7: #{tpu_custom_call.1} parent=1 // loop_footer_branch
      %16 = sbr.rel target = $region3
    $region8: #{tpu_custom_call.1} parent=1 // loop_exit
      _
    %1121 = vsyncpa [#allocation3], 1
    %s1122 = scalar_lea.sflag [#allocation3], 1
    %1123 = vsyncpa %s1122, 1
    %1124 = vsyncpa [#allocation6], 1
    %1125 = vsyncpa [#allocation4], 1
    %s1126 = scalar_lea.sflag [#allocation4], 1
    %1127 = vsyncpa %s1126, 1

</llo_original>
